<compile_context>
chip_gen: v6e
topology: v6e:2x2x1
jax: 0.10.0
libtpu: 0.0.40
codegen_flags: <defaults>
</compile_context>

<pallas_src>
import functools

import jax
import jax.numpy as jnp
from jax.experimental import pallas as pl
from jax.experimental.pallas import tpu as pltpu

LN_EPS = 1e-5
_INV_SQRT2 = 0.7071067811865476  # hoisted constant for exact (erf) GELU


def _round_up(x, m):
    return ((x + m - 1) // m) * m


def _vmem_capacity_bytes():
    """Physical VMEM per core, queried at trace time; conservative fallback."""
    try:
        info = pltpu.get_tpu_info()
        cap = getattr(info, "vmem_capacity_bytes", None)
        if cap:
            return int(cap)
    except Exception:
        pass
    return 64 * 1024 * 1024  # v7x per-TC VMEM (smallest of the three gens)


def mixer_kernel(x_ref, params_ref, w1t_ref, w2t_ref, o_ref, *,
                 matmul_dtype, approximate_gelu):
    # x_ref: (tm, C) tile of input rows (f32), lives in the pipeline VMEM buffer.
    x = x_ref[...]

    # Fused parameter block: rows = [gamma, beta, b1, b2], each (1, C).
    gamma = params_ref[0:1, :]
    beta = params_ref[1:2, :]
    b1 = params_ref[2:3, :]
    b2 = params_ref[3:4, :]

    # ---- LayerNorm over channel (last dim), f32 statistics ----
    mean = jnp.mean(x, axis=-1, keepdims=True)
    xc = x - mean
    var = jnp.mean(xc * xc, axis=-1, keepdims=True)
    h = xc * jax.lax.rsqrt(var + LN_EPS) * gamma + beta          # (tm, C) f32

    # ---- fc1: h @ W1.T + b1  (MXU, f32 accumulation) ----
    h1 = jnp.dot(h.astype(matmul_dtype), w1t_ref[...],
                 preferred_element_type=jnp.float32) + b1        # (tm, C) f32

    # ---- GELU ----
    if approximate_gelu:
        # tanh approximation -> EUP transcendental slot (nearly free filler).
        h1 = jax.nn.gelu(h1, approximate=True)
    else:
        # exact erf-based GELU, matching nn.GELU() default.  NOTE: this is the
        # slower option (VALU polynomial chain competing with casts/bias adds).
        h1 = 0.5 * h1 * (1.0 + jax.lax.erf(h1 * _INV_SQRT2))

    # ---- fc2: h1 @ W2.T + b2 ----
    h2 = jnp.dot(h1.astype(matmul_dtype), w2t_ref[...],
                 preferred_element_type=jnp.float32) + b2        # (tm, C) f32

    # ---- dropout (eval => identity) + residual ----
    # Re-read the input tile from its pipeline buffer rather than carrying a
    # second live f32 copy across both matmuls.
    o_ref[...] = (x_ref[...] + h2).astype(o_ref.dtype)


def mixer_layer_pallas(x, gamma, beta, w1, b1, w2, b2, *,
                       tm=512, use_bf16_matmul=True, approximate_gelu=False):
    """x: (B, S, C) float32. Weights follow PyTorch Linear convention (out, in).

    tm: row-tile size.  Good range: 256-1024 on v6e/v7x, ~128-256 on v5e (v5e
    hits the HBM roofline earlier and has a 16 MiB default scoped-VMEM; larger
    tiles buy nothing once the DMA is hidden).  The wrapper automatically
    shrinks tm if the estimated VMEM footprint exceeds ~87% of physical VMEM.
    For best MXU/store-lane utilization C should be a multiple of 128 (256 on
    v6e/v7x); the kernel is correct for any C.
    """
    B, S, C = x.shape
    N = B * S
    x2 = x.reshape(N, C)  # metadata reshape, no HBM copy

    # Matmul operand dtype (f32 accumulation either way).
    matmul_dtype = jnp.bfloat16 if use_bf16_matmul else jnp.float32
    w_bytes = 2 if use_bf16_matmul else 4

    # Pre-transpose Linear weights so the kernel does plain (tm,C)@(C,C) matmuls.
    w1t = w1.T.astype(matmul_dtype)
    w2t = w2.T.astype(matmul_dtype)
    # Fuse the four per-channel vectors into one (4, C) block -> single DMA.
    params = jnp.stack([gamma, beta, b1, b2], axis=0).astype(jnp.float32)

    # Single-buffer grid-invariant operands (constant index_map => no overlap
    # to be gained from double-buffering them).
    have_buffered = hasattr(pl, "Buffered")
    w_buf = 1 if have_buffered else 2

    def vmem_needed(t):
        return (2 * 2 * t * C * 4                # in + out row tiles, double-buffered
                + w_buf * 2 * C * C * w_bytes    # w1t + w2t (single-buffered)
                + w_buf * 4 * C * 4              # fused param block
                + (16 + 2 * w_bytes) * t * C     # f32 intermediates + bf16 casts
                + (2 << 20))                     # misc slack

    vmem_cap = int(0.87 * _vmem_capacity_bytes())

    # Effective row tile: multiple of 8 (f32 sublane), no larger than needed,
    # shrunk until the estimated footprint fits the generation's VMEM.
    tm_eff = min(_round_up(tm, 8), _round_up(N, 8))
    while vmem_needed(tm_eff) > vmem_cap and tm_eff > 64:
        tm_eff = max(64, _round_up(tm_eff // 2, 8))
    vmem_limit = int(min(max(vmem_needed(tm_eff), 32 * 1024 * 1024), vmem_cap))

    # Ragged last block handled by Pallas (OOB reads unspecified, OOB writes
    # dropped) -- no wrapper-side pad / slice, no extra HBM passes.
    grid = (pl.cdiv(N, tm_eff),)

    row_spec = pl.BlockSpec((tm_eff, C), lambda i: (i, 0))
    inv_kwargs = {"pipeline_mode": pl.Buffered(1)} if have_buffered else {}
    params_spec = pl.BlockSpec((4, C), lambda i: (0, 0), **inv_kwargs)
    weight_spec = pl.BlockSpec((C, C), lambda i: (0, 0), **inv_kwargs)

    kernel = functools.partial(mixer_kernel,
                               matmul_dtype=matmul_dtype,
                               approximate_gelu=approximate_gelu)

    out2 = pl.pallas_call(
        kernel,
        out_shape=jax.ShapeDtypeStruct((N, C), x.dtype),
        grid_spec=pltpu.PrefetchScalarGridSpec(
            num_scalar_prefetch=0,
            grid=grid,
            in_specs=[row_spec, params_spec, weight_spec, weight_spec],
            out_specs=row_spec,
        ),
        compiler_params=pltpu.CompilerParams(
            dimension_semantics=("parallel",),   # row tiles shard across megacore TCs
            vmem_limit_bytes=vmem_limit,
        ),
    )(x2, params, w1t, w2t)

    return out2.reshape(B, S, C)


def mixer_layer_ref(x, gamma, beta, w1, b1, w2, b2):
    mean = jnp.mean(x, axis=-1, keepdims=True)
    var = jnp.mean((x - mean) ** 2, axis=-1, keepdims=True)
    h = (x - mean) * jax.lax.rsqrt(var + LN_EPS) * gamma + beta
    h = h @ w1.T + b1
    h = jax.nn.gelu(h, approximate=False)
    h = h @ w2.T + b2
    return x + h


def _make_params(key, C):
    kg, kb, kw1, kb1, kw2, kb2 = jax.random.split(key, 6)
    gamma = jnp.ones((C,), jnp.float32) + 0.01 * jax.random.normal(kg, (C,))
    beta = 0.01 * jax.random.normal(kb, (C,), dtype=jnp.float32)
    w1 = jax.random.normal(kw1, (C, C), dtype=jnp.float32) * (1.0 / jnp.sqrt(C))
    b1 = 0.01 * jax.random.normal(kb1, (C,), dtype=jnp.float32)
    w2 = jax.random.normal(kw2, (C, C), dtype=jnp.float32) * (1.0 / jnp.sqrt(C))
    b2 = 0.01 * jax.random.normal(kb2, (C,), dtype=jnp.float32)
    return gamma, beta, w1, b1, w2, b2


if __name__ == "__main__":
    key = jax.random.PRNGKey(0)

    # ---- small config matching the module spec (batch=2, seq=8, channel=32) ----
    B, S, C = 2, 8, 32
    kx, kp = jax.random.split(key)
    x = jax.random.normal(kx, (B, S, C), dtype=jnp.float32)
    gamma, beta, w1, b1, w2, b2 = _make_params(kp, C)
    ref = mixer_layer_ref(x, gamma, beta, w1, b1, w2, b2)

    # Exact f32 path (semantics check, tight tolerance).
    out_f32 = jax.block_until_ready(
        mixer_layer_pallas(x, gamma, beta, w1, b1, w2, b2,
                           use_bf16_matmul=False))
    assert out_f32.shape == (B, S, C)
    assert jnp.allclose(out_f32, ref, atol=2e-4, rtol=2e-4), \
        f"f32 max err {jnp.max(jnp.abs(out_f32 - ref))}"

    # Optimized bf16-matmul path (default), looser tolerance for bf16 operands.
    out_bf16 = jax.block_until_ready(
        mixer_layer_pallas(x, gamma, beta, w1, b1, w2, b2))
    assert jnp.allclose(out_bf16, ref, atol=5e-2, rtol=5e-2), \
        f"bf16 max err {jnp.max(jnp.abs(out_bf16 - ref))}"

    # ---- medium config exercising multi-step grid + ragged last block + tanh GELU ----
    B2, S2, C2 = 5, 200, 128  # N = 1000 rows, tm=512 -> grid = 2 with a ragged tail
    kx2, kp2 = jax.random.split(jax.random.PRNGKey(1))
    x2 = jax.random.normal(kx2, (B2, S2, C2), dtype=jnp.float32)
    g2, be2, w12, b12, w22, b22 = _make_params(kp2, C2)
    ref2 = mixer_layer_ref(x2, g2, be2, w12, b12, w22, b22)
    out2 = jax.block_until_ready(
        mixer_layer_pallas(x2, g2, be2, w12, b12, w22, b22,
                           tm=512, approximate_gelu=True))
    assert out2.shape == (B2, S2, C2)
    assert jnp.allclose(out2, ref2, atol=1e-1, rtol=1e-1), \
        f"medium max err {jnp.max(jnp.abs(out2 - ref2))}"

    print("KERNEL_OK")
</pallas_src>

<mosaic_0001>
module attributes {stable_mosaic.version = 11 : i64} {
  func.func @mixer_kernel(%arg0: i32, %arg1: memref<16x32xf32, #tpu.memory_space<vmem>>, %arg2: memref<4x32xf32, #tpu.memory_space<vmem>>, %arg3: memref<32x32xf32, #tpu.memory_space<vmem>>, %arg4: memref<32x32xf32, #tpu.memory_space<vmem>>, %arg5: memref<16x32xf32, #tpu.memory_space<vmem>>) attributes {dimension_semantics = [#tpu.dimension_semantics<parallel>], iteration_bounds = array<i64: 1>, scalar_prefetch = 0 : i64, scratch_operands = 0 : i64, tpu.core_type = #tpu.core_type<tc>, window_params = [{transform_indices = @transform_0, window_bounds = array<i64: 16, 32>}, {pipeline_mode = #tpu.pipeline_mode<synchronous>, transform_indices = @transform_1, window_bounds = array<i64: 4, 32>}, {pipeline_mode = #tpu.pipeline_mode<synchronous>, transform_indices = @transform_2, window_bounds = array<i64: 32, 32>}, {pipeline_mode = #tpu.pipeline_mode<synchronous>, transform_indices = @transform_3, window_bounds = array<i64: 32, 32>}, {transform_indices = @transform_4, window_bounds = array<i64: 16, 32>}]} {
    %c0 = arith.constant 0 : index
    %c0_0 = arith.constant 0 : index
    %0 = vector.load %arg1[%c0, %c0_0] : memref<16x32xf32, #tpu.memory_space<vmem>>, vector<16x32xf32>
    %c0_1 = arith.constant 0 : index
    %c0_2 = arith.constant 0 : index
    %1 = vector.load %arg2[%c0_1, %c0_2] : memref<4x32xf32, #tpu.memory_space<vmem>>, vector<1x32xf32>
    %c1 = arith.constant 1 : index
    %c0_3 = arith.constant 0 : index
    %2 = vector.load %arg2[%c1, %c0_3] : memref<4x32xf32, #tpu.memory_space<vmem>>, vector<1x32xf32>
    %c2 = arith.constant 2 : index
    %c0_4 = arith.constant 0 : index
    %3 = vector.load %arg2[%c2, %c0_4] : memref<4x32xf32, #tpu.memory_space<vmem>>, vector<1x32xf32>
    %c3 = arith.constant 3 : index
    %c0_5 = arith.constant 0 : index
    %4 = vector.load %arg2[%c3, %c0_5] : memref<4x32xf32, #tpu.memory_space<vmem>>, vector<1x32xf32>
    %cst = arith.constant dense<0.000000e+00> : vector<16xf32>
    %5 = vector.multi_reduction <add>, %0, %cst [1] : vector<16x32xf32> to vector<16xf32>
    %6 = vector.shape_cast %5 : vector<16xf32> to vector<16x1xf32>
    %cst_6 = arith.constant 3.200000e+01 : f32
    %7 = vector.broadcast %cst_6 : f32 to vector<16x1xf32>
    %8 = arith.divf %6, %7 : vector<16x1xf32>
    %9 = vector.broadcast %8 : vector<16x1xf32> to vector<16x32xf32>
    %10 = arith.subf %0, %9 : vector<16x32xf32>
    %11 = arith.mulf %10, %10 : vector<16x32xf32>
    %cst_7 = arith.constant dense<0.000000e+00> : vector<16xf32>
    %12 = vector.multi_reduction <add>, %11, %cst_7 [1] : vector<16x32xf32> to vector<16xf32>
    %13 = vector.shape_cast %12 : vector<16xf32> to vector<16x1xf32>
    %cst_8 = arith.constant 3.200000e+01 : f32
    %14 = vector.broadcast %cst_8 : f32 to vector<16x1xf32>
    %15 = arith.divf %13, %14 : vector<16x1xf32>
    %cst_9 = arith.constant 9.99999974E-6 : f32
    %16 = vector.broadcast %cst_9 : f32 to vector<16x1xf32>
    %17 = arith.addf %15, %16 : vector<16x1xf32>
    %18 = math.rsqrt %17 : vector<16x1xf32>
    %19 = vector.broadcast %18 : vector<16x1xf32> to vector<16x32xf32>
    %20 = arith.mulf %10, %19 : vector<16x32xf32>
    %21 = vector.broadcast %1 : vector<1x32xf32> to vector<16x32xf32>
    %22 = arith.mulf %20, %21 : vector<16x32xf32>
    %23 = vector.broadcast %2 : vector<1x32xf32> to vector<16x32xf32>
    %24 = arith.addf %22, %23 : vector<16x32xf32>
    %c0_10 = arith.constant 0 : index
    %c0_11 = arith.constant 0 : index
    %25 = vector.load %arg3[%c0_10, %c0_11] : memref<32x32xf32, #tpu.memory_space<vmem>>, vector<32x32xf32>
    %cst_12 = arith.constant dense<0.000000e+00> : vector<16x32xf32>
    %26 = tpu.matmul %24, %25, %cst_12 {dimension_numbers = #tpu.dot_dimension_numbers<[1], [0], [0], [1], [0, 0, 1, 1], [], []>} : vector<16x32xf32>, vector<32x32xf32>, vector<16x32xf32> -> vector<16x32xf32>
    %27 = vector.broadcast %3 : vector<1x32xf32> to vector<16x32xf32>
    %28 = arith.addf %26, %27 : vector<16x32xf32>
    %cst_13 = arith.constant 5.000000e-01 : f32
    %29 = vector.broadcast %cst_13 : f32 to vector<16x32xf32>
    %30 = arith.mulf %29, %28 : vector<16x32xf32>
    %cst_14 = arith.constant 0.707106769 : f32
    %31 = vector.broadcast %cst_14 : f32 to vector<16x32xf32>
    %32 = arith.mulf %28, %31 : vector<16x32xf32>
    %33 = math.erf %32 : vector<16x32xf32>
    %cst_15 = arith.constant 1.000000e+00 : f32
    %34 = vector.broadcast %cst_15 : f32 to vector<16x32xf32>
    %35 = arith.addf %34, %33 : vector<16x32xf32>
    %36 = arith.mulf %30, %35 : vector<16x32xf32>
    %c0_16 = arith.constant 0 : index
    %c0_17 = arith.constant 0 : index
    %37 = vector.load %arg4[%c0_16, %c0_17] : memref<32x32xf32, #tpu.memory_space<vmem>>, vector<32x32xf32>
    %cst_18 = arith.constant dense<0.000000e+00> : vector<16x32xf32>
    %38 = tpu.matmul %36, %37, %cst_18 {dimension_numbers = #tpu.dot_dimension_numbers<[1], [0], [0], [1], [0, 0, 1, 1], [], []>} : vector<16x32xf32>, vector<32x32xf32>, vector<16x32xf32> -> vector<16x32xf32>
    %39 = vector.broadcast %4 : vector<1x32xf32> to vector<16x32xf32>
    %40 = arith.addf %38, %39 : vector<16x32xf32>
    %c0_19 = arith.constant 0 : index
    %c0_20 = arith.constant 0 : index
    %41 = vector.load %arg1[%c0_19, %c0_20] : memref<16x32xf32, #tpu.memory_space<vmem>>, vector<16x32xf32>
    %42 = arith.addf %41, %40 : vector<16x32xf32>
    %c0_21 = arith.constant 0 : index
    %c0_22 = arith.constant 0 : index
    %43 = vector.load %arg5[%c0_21, %c0_22] : memref<16x32xf32, #tpu.memory_space<vmem>>, vector<16x32xf32>
    tpu.vector_store %arg5[%c0_21, %c0_22], %42 {strides = array<i32>} : memref<16x32xf32, #tpu.memory_space<vmem>>, vector<16x32xf32>,
    return
  }
  func.func @transform_0(%arg0: i32) -> (i32, i32) {
    %c0_i32 = arith.constant 0 : i32
    %c0_i32_0 = arith.constant 0 : i32
    return %arg0, %c0_i32 : i32, i32
  }
  func.func @transform_1(%arg0: i32) -> (i32, i32) {
    %c0_i32 = arith.constant 0 : i32
    %c0_i32_0 = arith.constant 0 : i32
    %c0_i32_1 = arith.constant 0 : i32
    return %c0_i32, %c0_i32_0 : i32, i32
  }
  func.func @transform_2(%arg0: i32) -> (i32, i32) {
    %c0_i32 = arith.constant 0 : i32
    %c0_i32_0 = arith.constant 0 : i32
    %c0_i32_1 = arith.constant 0 : i32
    return %c0_i32, %c0_i32_0 : i32, i32
  }
  func.func @transform_3(%arg0: i32) -> (i32, i32) {
    %c0_i32 = arith.constant 0 : i32
    %c0_i32_0 = arith.constant 0 : i32
    %c0_i32_1 = arith.constant 0 : i32
    return %c0_i32, %c0_i32_0 : i32, i32
  }
  func.func @transform_4(%arg0: i32) -> (i32, i32) {
    %c0_i32 = arith.constant 0 : i32
    %c0_i32_0 = arith.constant 0 : i32
    return %arg0, %c0_i32 : i32, i32
  }
}

</mosaic_0001>

<llo_original>
// kernel: tpu_custom_call.1
$region0: #{tpu_custom_call.1}
  #allocation0 [shape = 'u32[]', space=smem, size = 0x4, offset = 0x4, fixed_abs, tag = 'smem constant byte address 0x4 - core index']
  #allocation1 [shape = 'u32[144,128]{1,0:T(1,128)}', space=vmem, size = 0x12000, scoped, tag = 'internal scratch']
  %s0 = inlined_call_operand.hbm [shape: f32[16,32], index: 0, kind: input, shape index: {}]
  %s1 = inlined_call_operand.hbm [shape: f32[4,32], index: 1, kind: input, shape index: {}]
  %s2 = inlined_call_operand.hbm [shape: f32[32,32], index: 2, kind: input, shape index: {}]
  %s3 = inlined_call_operand.hbm [shape: f32[32,32], index: 3, kind: input, shape index: {}]
  %s4 = inlined_call_operand.hbm [shape: f32[16,32], index: 4, kind: output, shape index: {}]
  %s5 = sld [smem:[#allocation0]]
  $region42: #{tpu_custom_call.1} parent=0
    _
  %s7 = ssub.s32 1, %s5
  %s8 = scalar_select 0, %s7, %s5
  $region1: #{tpu_custom_call.1} parent=0
    #allocation2 [shape = 'u8[8192]{0}', space=vmem, size = 0x2000, scoped, tag = 'input window, operand 0, single buffered']
    #allocation3 [shape = 's32[1]{0}', space=sflag, size = 0x4, scoped, tag = 'scoped memory for tpu_custom_call.1']
    #allocation4 [shape = 's32[1]{0}', space=sflag, size = 0x4, scoped, tag = 'scoped memory for tpu_custom_call.1']
    #allocation5 [shape = 'u8[2048]{0}', space=vmem, size = 0x800, scoped, tag = 'input window, operand 1, single buffered']
    #allocation6 [shape = 's32[1]{0}', space=sflag, size = 0x4, scoped, tag = 'scoped memory for tpu_custom_call.1']
    #allocation7 [shape = 'u8[16384]{0}', space=vmem, size = 0x4000, scoped, tag = 'input window, operand 2, single buffered']
    #allocation8 [shape = 'u8[16384]{0}', space=vmem, size = 0x4000, scoped, tag = 'input window, operand 3, single buffered']
    #allocation9 [shape = 's32[1]{0}', space=sflag, size = 0x4, scoped, tag = 'scoped memory for tpu_custom_call.1']
    #allocation10 [shape = 'u8[8192]{0}', space=vmem, size = 0x2000, scoped, tag = 'output window, operand 0, single buffered']
    %9 = vsyncpa [#allocation3], 0
    %10 = vsyncpa [#allocation6], 0
    %11 = vsyncpa [#allocation9], 0
    %12 = vsyncpa [#allocation4], 0
    // Predicated region
    $region2: #{tpu_custom_call.1} parent=1 // pred_check
      _
    $region3: #{tpu_custom_call.1} parent=1 // pred_check_branch
      %14 = sbr.rel (0) target = $region5
    $region4: #{tpu_custom_call.1} parent=1 // pred_region
      %s16 = ssub.s32 256, 256
      %17 = vsyncadd [#allocation3], %s16
      %s18 = sshll.u32 [#allocation2], 4
      %s19 = int_to_ptr.vmem [resolvable:$true] %s18
      %24 = dma.hbm_to_vmem [thread:$0]  %s0, 256, %s19, [#allocation3], 128, 128, 8
    $region5: #{tpu_custom_call.1} parent=1 // pred_fallthru
      _
    // Predicated region
    $region6: #{tpu_custom_call.1} parent=1 // pred_check
      _
    $region7: #{tpu_custom_call.1} parent=1 // pred_check_branch
      %26 = sbr.rel (0) target = $region9
    $region8: #{tpu_custom_call.1} parent=1 // pred_region
      %s28 = ssub.s32 64, 64
      %29 = vsyncadd [#allocation6], %s28
      %s31 = sshll.u32 [#allocation5], 4
      %s32 = int_to_ptr.vmem [resolvable:$true] %s31
      %34 = dma.hbm_to_vmem [thread:$0]  %s1, 64, %s32, [#allocation6]
    $region9: #{tpu_custom_call.1} parent=1 // pred_fallthru
      _
    // Predicated region
    $region10: #{tpu_custom_call.1} parent=1 // pred_check
      _
    $region11: #{tpu_custom_call.1} parent=1 // pred_check_branch
      %36 = sbr.rel (0) target = $region13
    $region12: #{tpu_custom_call.1} parent=1 // pred_region
      %s38 = ssub.s32 512, 512
      %39 = vsyncadd [#allocation6], %s38
      %s40 = sshll.u32 [#allocation7], 4
      %s41 = int_to_ptr.vmem [resolvable:$true] %s40
      %46 = dma.hbm_to_vmem [thread:$0]  %s2, 512, %s41, [#allocation6], 128, 128, 8
    $region13: #{tpu_custom_call.1} parent=1 // pred_fallthru
      _
    // Predicated region
    $region14: #{tpu_custom_call.1} parent=1 // pred_check
      _
    $region15: #{tpu_custom_call.1} parent=1 // pred_check_branch
      %48 = sbr.rel (0) target = $region17
    $region16: #{tpu_custom_call.1} parent=1 // pred_region
      %s50 = ssub.s32 512, 512
      %51 = vsyncadd [#allocation9], %s50
      %s52 = sshll.u32 [#allocation8], 4
      %s53 = int_to_ptr.vmem [resolvable:$true] %s52
      %58 = dma.hbm_to_vmem [thread:$0]  %s3, 512, %s53, [#allocation9], 128, 128, 8
    $region17: #{tpu_custom_call.1} parent=1 // pred_fallthru
      _
    // Predicated region
    $region18: #{tpu_custom_call.1} parent=1 // pred_check
      _
    $region19: #{tpu_custom_call.1} parent=1 // pred_check_branch
      %60 = sbr.rel (0) target = $region21
    $region20: #{tpu_custom_call.1} parent=1 // pred_region
      %61 = dma.done [#allocation3], 256
    $region21: #{tpu_custom_call.1} parent=1 // pred_fallthru
      _
    // Predicated region
    $region22: #{tpu_custom_call.1} parent=1 // pred_check
      _
    $region23: #{tpu_custom_call.1} parent=1 // pred_check_branch
      %63 = sbr.rel (0) target = $region25
    $region24: #{tpu_custom_call.1} parent=1 // pred_region
      %64 = dma.done [#allocation6], 64
    $region25: #{tpu_custom_call.1} parent=1 // pred_fallthru
      _
    // Predicated region
    $region26: #{tpu_custom_call.1} parent=1 // pred_check
      _
    $region27: #{tpu_custom_call.1} parent=1 // pred_check_branch
      %66 = sbr.rel (0) target = $region29
    $region28: #{tpu_custom_call.1} parent=1 // pred_region
      %67 = dma.done [#allocation6], 512
    $region29: #{tpu_custom_call.1} parent=1 // pred_fallthru
      _
    // Predicated region
    $region30: #{tpu_custom_call.1} parent=1 // pred_check
      _
    $region31: #{tpu_custom_call.1} parent=1 // pred_check_branch
      %69 = sbr.rel (0) target = $region33
    $region32: #{tpu_custom_call.1} parent=1 // pred_region
      %70 = dma.done [#allocation9], 512
    $region33: #{tpu_custom_call.1} parent=1 // pred_fallthru
      _
    %v71 = vld [vmem:[#allocation2] sm:$0xff]
    %v72 = vld [vmem:[#allocation2 + $0x8] sm:$0xff]
    %v73 = vld [vmem:[#allocation5] sm:$0x1]
    %v74 = vld [vmem:[#allocation5 + $0x1] sm:$0x1]
    %v75 = vld [vmem:[#allocation5 + $0x2] sm:$0x1]
    %v76 = vld [vmem:[#allocation5 + $0x3] sm:$0x1]
    %vm77 = vcmask 261120
    %v78 = vsel %vm77, %v71, 0.0
    %79 = vadd.xlane.f32.xlu0 %v78
    %v80 = vpop.xlane.xlu0 %79
    %v81 = vsel %vm77, %v72, 0.0
    %82 = vadd.xlane.f32.xlu0 %v81
    %v83 = vpop.xlane.xlu0 %82
    %v84 = vrcp.pop 32.0
    %v85 = vmul.f32 %v80, %v84
    %v86 = vmul.f32 %v83, %v84
    %v87 = vsub.f32 %v71, %v85
    %v88 = vsub.f32 %v72, %v86
    %v89 = vmul.f32 %v87, %v87
    %v90 = vmul.f32 %v88, %v88
    %v91 = vsel %vm77, %v89, 0.0
    %92 = vadd.xlane.f32.xlu0 %v91
    %v93 = vpop.xlane.xlu0 %92
    %v94 = vsel %vm77, %v90, 0.0
    %95 = vadd.xlane.f32.xlu0 %v94
    %v96 = vpop.xlane.xlu0 %95
    %v97 = vmul.f32 %v93, %v84
    %v98 = vmul.f32 %v96, %v84
    %v99 = vadd.f32 %v97, 1e-05
    %v100 = vadd.f32 %v98, 1e-05
    %v101 = vrsqrt.pop %v99
    %v102 = vrsqrt.pop %v100
    %v103 = vmul.f32 %v87, %v101
    %v104 = vmul.f32 %v88, %v102
    %v105 = vlaneseq
    %v106 = vshrl.u32 %v105, 7
    %v107 = vsub.s32 0, %v106
    %v108 = vrot.slane %v73, %v107
    %v109 = vmul.f32 %v103, %v108
    %v110 = vmul.f32 %v104, %v108
    %v111 = vlaneseq
    %v112 = vshrl.u32 %v111, 7
    %v113 = vsub.s32 0, %v112
    %v114 = vrot.slane %v74, %v113
    %v115 = vadd.f32 %v109, %v114
    %v116 = vadd.f32 %v110, %v114
    %v117 = vld [vmem:[#allocation7] sm:$0xff]
    %v118 = vld [vmem:[#allocation7 + $0x8] sm:$0xff]
    %v119 = vld [vmem:[#allocation7 + $0x10] sm:$0xff]
    %v120 = vld [vmem:[#allocation7 + $0x18] sm:$0xff]
    %v121 = vlaneseq
    %v122 = vshrl.u32 %v121, 7
    %v123 = vsub.s32 0, %v122
    %v124 = vrot.slane %v75, %v123
    %v126 = vsel %vm77, %v115, 0
    %v129 = vsel %vm77, %v116, 0
    %131 = vmatprep.subr.mxu0 0.0
    %132 = vmatpush1.msra.mxu0 0.0
    %133 = vmatprep.subr.mxu0 0.0
    %134 = vmatpush1.msra.mxu0 0.0
    %135 = vmatprep.subr.mxu0 0.0
    %136 = vmatpush1.msra.mxu0 0.0
    %137 = vmatprep.subr.mxu0 0.0
    %138 = vmatpush1.msra.mxu0 0.0
    %139 = vmatprep.subr.mxu0 0.0
    %140 = vmatpush1.msra.mxu0 0.0
    %141 = vmatprep.subr.mxu0 0.0
    %142 = vmatpush1.msra.mxu0 0.0
    %143 = vmatprep.subr.mxu0 0.0
    %144 = vmatpush1.msra.mxu0 0.0
    %145 = vmatprep.subr.mxu0 0.0
    %146 = vmatpush1.msra.mxu0 0.0
    %147 = vmatprep.subr.mxu0 0.0
    %148 = vmatpush1.msra.mxu0 0.0
    %149 = vmatprep.subr.mxu0 0.0
    %150 = vmatpush1.msra.mxu0 0.0
    %151 = vmatprep.subr.mxu0 0.0
    %152 = vmatpush1.msra.mxu0 0.0
    %153 = vmatprep.subr.mxu0 0.0
    %154 = vmatpush1.msra.mxu0 0.0
    %155 = vmatprep.subr.mxu0 0.0
    %156 = vmatpush1.msra.mxu0 %v120
    %157 = vmatprep.subr.mxu0 0.0
    %158 = vmatpush1.msra.mxu0 %v119
    %159 = vmatprep.subr.mxu0 0.0
    %160 = vmatpush1.msra.mxu0 %v118
    %161 = vmatprep.subr.mxu0 0.0
    %162 = vmatpush1.msra.mxu0 %v117
    %163 = vmatprep.subr.mxu0 0.0
    %164 = vmatpush2.msra.mxu0 0.0
    %165 = vmatprep.subr.mxu0 0.0
    %166 = vmatpush2.msra.mxu0 0.0
    %167 = vmatprep.subr.mxu0 0.0
    %168 = vmatpush2.msra.mxu0 0.0
    %169 = vmatprep.subr.mxu0 0.0
    %170 = vmatpush2.msra.mxu0 0.0
    %171 = vmatprep.subr.mxu0 0.0
    %172 = vmatpush2.msra.mxu0 0.0
    %173 = vmatprep.subr.mxu0 0.0
    %174 = vmatpush2.msra.mxu0 0.0
    %175 = vmatprep.subr.mxu0 0.0
    %176 = vmatpush2.msra.mxu0 0.0
    %177 = vmatprep.subr.mxu0 0.0
    %178 = vmatpush2.msra.mxu0 0.0
    %179 = vmatprep.subr.mxu0 0.0
    %180 = vmatpush2.msra.mxu0 0.0
    %181 = vmatprep.subr.mxu0 0.0
    %182 = vmatpush2.msra.mxu0 0.0
    %183 = vmatprep.subr.mxu0 0.0
    %184 = vmatpush2.msra.mxu0 0.0
    %185 = vmatprep.subr.mxu0 0.0
    %186 = vmatpush2.msra.mxu0 0.0
    %187 = vmatprep.subr.mxu0 0.0
    %188 = vmatpush2.msra.mxu0 0.0
    %189 = vmatprep.subr.mxu0 0.0
    %190 = vmatpush2.msra.mxu0 0.0
    %191 = vmatprep.subr.mxu0 0.0
    %192 = vmatpush2.msra.mxu0 0.0
    %193 = vmatprep.subr.mxu0 0.0
    %194 = vmatpush2.msra.mxu0 0.0
    %195 = vmatprep.mubr.f32.mxu0 0.0
    %196 = vmatmul.mubr.f32.gmra.mxu0 %v126
    %v197 = vpop.f32.mrf.mxu0
    %v198 = vadd.f32 %v124, %v197
    %v199 = vpop.f32.mrf.mxu0
    %200 = vmatprep.mubr.f32.mxu0 0.0
    %201 = vmatmul.mubr.f32.gmra.mxu0 %v129
    %v202 = vpop.f32.mrf.mxu0
    %v203 = vadd.f32 %v124, %v202
    %v204 = vpop.f32.mrf.mxu0
    %205 = vdwg.mxu0
    %v206 = vmul.f32 %v198, 0.5
    %v207 = vmul.f32 %v203, 0.5
    %v208 = vmul.f32 %v198, 0.70710677
    %v209 = vmul.f32 %v203, 0.70710677
    %v210 = verf.f32.pop %v208
    %v211 = verf.f32.pop %v209
    %v212 = vadd.f32 %v210, 1.0
    %v213 = vadd.f32 %v211, 1.0
    %v214 = vmul.f32 %v206, %v212
    %v215 = vmul.f32 %v207, %v213
    %v216 = vld [vmem:[#allocation8] sm:$0xff]
    %v217 = vld [vmem:[#allocation8 + $0x8] sm:$0xff]
    %v218 = vld [vmem:[#allocation8 + $0x10] sm:$0xff]
    %v219 = vld [vmem:[#allocation8 + $0x18] sm:$0xff]
    %v220 = vlaneseq
    %v221 = vshrl.u32 %v220, 7
    %v222 = vsub.s32 0, %v221
    %v223 = vrot.slane %v76, %v222
    %v225 = vsel %vm77, %v214, 0
    %v228 = vsel %vm77, %v215, 0
    %230 = vmatprep.subr.mxu0 0.0
    %231 = vmatpush1.msra.mxu0 0.0
    %232 = vmatprep.subr.mxu0 0.0
    %233 = vmatpush1.msra.mxu0 0.0
    %234 = vmatprep.subr.mxu0 0.0
    %235 = vmatpush1.msra.mxu0 0.0
    %236 = vmatprep.subr.mxu0 0.0
    %237 = vmatpush1.msra.mxu0 0.0
    %238 = vmatprep.subr.mxu0 0.0
    %239 = vmatpush1.msra.mxu0 0.0
    %240 = vmatprep.subr.mxu0 0.0
    %241 = vmatpush1.msra.mxu0 0.0
    %242 = vmatprep.subr.mxu0 0.0
    %243 = vmatpush1.msra.mxu0 0.0
    %244 = vmatprep.subr.mxu0 0.0
    %245 = vmatpush1.msra.mxu0 0.0
    %246 = vmatprep.subr.mxu0 0.0
    %247 = vmatpush1.msra.mxu0 0.0
    %248 = vmatprep.subr.mxu0 0.0
    %249 = vmatpush1.msra.mxu0 0.0
    %250 = vmatprep.subr.mxu0 0.0
    %251 = vmatpush1.msra.mxu0 0.0
    %252 = vmatprep.subr.mxu0 0.0
    %253 = vmatpush1.msra.mxu0 0.0
    %254 = vmatprep.subr.mxu0 0.0
    %255 = vmatpush1.msra.mxu0 %v219
    %256 = vmatprep.subr.mxu0 0.0
    %257 = vmatpush1.msra.mxu0 %v218
    %258 = vmatprep.subr.mxu0 0.0
    %259 = vmatpush1.msra.mxu0 %v217
    %260 = vmatprep.subr.mxu0 0.0
    %261 = vmatpush1.msra.mxu0 %v216
    %262 = vmatprep.subr.mxu0 0.0
    %263 = vmatpush2.msra.mxu0 0.0
    %264 = vmatprep.subr.mxu0 0.0
    %265 = vmatpush2.msra.mxu0 0.0
    %266 = vmatprep.subr.mxu0 0.0
    %267 = vmatpush2.msra.mxu0 0.0
    %268 = vmatprep.subr.mxu0 0.0
    %269 = vmatpush2.msra.mxu0 0.0
    %270 = vmatprep.subr.mxu0 0.0
    %271 = vmatpush2.msra.mxu0 0.0
    %272 = vmatprep.subr.mxu0 0.0
    %273 = vmatpush2.msra.mxu0 0.0
    %274 = vmatprep.subr.mxu0 0.0
    %275 = vmatpush2.msra.mxu0 0.0
    %276 = vmatprep.subr.mxu0 0.0
    %277 = vmatpush2.msra.mxu0 0.0
    %278 = vmatprep.subr.mxu0 0.0
    %279 = vmatpush2.msra.mxu0 0.0
    %280 = vmatprep.subr.mxu0 0.0
    %281 = vmatpush2.msra.mxu0 0.0
    %282 = vmatprep.subr.mxu0 0.0
    %283 = vmatpush2.msra.mxu0 0.0
    %284 = vmatprep.subr.mxu0 0.0
    %285 = vmatpush2.msra.mxu0 0.0
    %286 = vmatprep.subr.mxu0 0.0
    %287 = vmatpush2.msra.mxu0 0.0
    %288 = vmatprep.subr.mxu0 0.0
    %289 = vmatpush2.msra.mxu0 0.0
    %290 = vmatprep.subr.mxu0 0.0
    %291 = vmatpush2.msra.mxu0 0.0
    %292 = vmatprep.subr.mxu0 0.0
    %293 = vmatpush2.msra.mxu0 0.0
    %294 = vmatprep.mubr.f32.mxu0 0.0
    %295 = vmatmul.mubr.f32.gmra.mxu0 %v225
    %v296 = vpop.f32.mrf.mxu0
    %v297 = vadd.f32 %v223, %v296
    %v298 = vpop.f32.mrf.mxu0
    %299 = vmatprep.mubr.f32.mxu0 0.0
    %300 = vmatmul.mubr.f32.gmra.mxu0 %v228
    %v301 = vpop.f32.mrf.mxu0
    %v302 = vadd.f32 %v223, %v301
    %v303 = vpop.f32.mrf.mxu0
    %304 = vdwg.mxu0
    %v305 = vadd.f32 %v71, %v297
    %v306 = vadd.f32 %v72, %v302
    %307 = vst.msk [vmem:[#allocation10] sm:$0xff] %vm77, %v305
    %308 = vst.msk [vmem:[#allocation10 + $0x8] sm:$0xff] %vm77, %v306
    // Predicated region
    $region34: #{tpu_custom_call.1} parent=1 // pred_check
      _
    $region35: #{tpu_custom_call.1} parent=1 // pred_check_branch
      %310 = sbr.rel (0) target = $region37
    $region36: #{tpu_custom_call.1} parent=1 // pred_region
      %s312 = ssub.s32 256, 256
      %313 = vsyncadd [#allocation4], %s312
      %s314 = sshll.u32 [#allocation10], 4
      %s315 = int_to_ptr.vmem [resolvable:$true] %s314
      %320 = dma.vmem_to_hbm [thread:$0]  %s315, 256, %s4, [#allocation4], 128, 128, 8
    $region37: #{tpu_custom_call.1} parent=1 // pred_fallthru
      _
    // Predicated region
    $region38: #{tpu_custom_call.1} parent=1 // pred_check
      _
    $region39: #{tpu_custom_call.1} parent=1 // pred_check_branch
      %322 = sbr.rel (0) target = $region41
    $region40: #{tpu_custom_call.1} parent=1 // pred_region
      %323 = dma.done [#allocation4], 256
    $region41: #{tpu_custom_call.1} parent=1 // pred_fallthru
      _
    %324 = vsyncpa [#allocation3], 1
    %325 = vsyncpa [#allocation6], 1
    %326 = vsyncpa [#allocation9], 1
    %327 = vsyncpa [#allocation4], 1

</llo_original>
